<compile_context>
chip_gen: v7x
topology: tpu7x:2x2x1
jax: 0.10.0
libtpu: 0.0.40
codegen_flags: <defaults>
</compile_context>

<pallas_src>
import functools
import math

import jax
import jax.numpy as jnp
from jax.experimental import pallas as pl
from jax.experimental.pallas import tpu as pltpu


def _pe_add_kernel(x_ref, pe_ref, o_ref, *, batch):
    # Eval mode: dropout is identity.
    # pe_ref: (tile_s, D) -> tile along lanes to (tile_s, B*D); lane index = b*D + d.
    pe = jnp.tile(pe_ref[...].astype(x_ref.dtype), (1, batch))
    o_ref[...] = x_ref[...] + pe


def _pe_add_dropout_kernel(x_ref, pe_ref, bits_ref, o_ref, *, batch, p):
    # Training mode: y = (x + pe) * keep / (1 - p); keep drawn from a uint32 stream
    # with a single integer threshold compare (P(bits >= p*2^32) == 1 - p).
    pe = jnp.tile(pe_ref[...].astype(x_ref.dtype), (1, batch))
    y = x_ref[...] + pe
    thresh = jnp.asarray(min(int(round(p * 4294967296.0)), 4294967295), dtype=jnp.uint32)
    keep = bits_ref[...] >= thresh
    scale = jnp.asarray(1.0 / (1.0 - p), dtype=y.dtype)
    o_ref[...] = jnp.where(keep, y * scale, jnp.zeros_like(y))


def make_positional_encoding_table(d_model, max_len=5000, dtype=jnp.float32):
    """Precompute the (max_len, 1, d_model) sin/cos buffer (== torch register_buffer).

    Pre-cast once here; the forward never re-slices or re-casts the table."""
    position = jnp.arange(max_len, dtype=jnp.float32)[:, None]
    div_term = jnp.exp(jnp.arange(0, d_model, 2, dtype=jnp.float32)
                       * (-math.log(10000.0) / d_model))
    angles = position * div_term                      # (max_len, d_model//2)
    pe = jnp.zeros((max_len, d_model), jnp.float32)
    pe = pe.at[:, 0::2].set(jnp.sin(angles))
    pe = pe.at[:, 1::2].set(jnp.cos(angles))
    return pe[:, None, :].astype(dtype)               # (max_len, 1, d_model)


def _pick_tile_s(S, row_bytes, target_bytes=2 << 20):
    """Largest multiple-of-8 divisor of S whose x tile is <= ~target_bytes.

    The pipeline double-buffers every spec'd array, so live VMEM is roughly
    2*(x_tile + out_tile [+ bits_tile] + pe_tile) ~= 5-7x the x tile; a ~2 MiB
    x tile keeps the working set inside v5e's 16 MiB scoped default and v7x's
    64 MiB physical VMEM while staying in the measured DMA sweet spot."""
    if S % 8 != 0:
        return S  # sublane dim must equal the full extent when not 8-aligned
    divisors = [t for t in range(8, S + 1, 8) if S % t == 0]
    fitting = [t for t in divisors if t * row_bytes <= target_bytes]
    tile = max(fitting) if fitting else min(divisors)
    # Prefer >=2 grid steps so the "parallel" axis can shard over v7x's 2 TCs.
    if tile == S and (S // 2) in divisors:
        tile = S // 2
    return tile


def positional_encoding_pallas(x, pe, *, dropout_p=0.1, training=False,
                               rng_key=None, tile_s=None):
    """x: (seq_len, batch, d_model); pe: (max_len, 1, d_model) from the table above."""
    S, B, D = x.shape
    max_len = pe.shape[0]
    assert max_len >= S and pe.shape[1] == 1 and pe.shape[2] == D
    BD = B * D

    # Free, contiguous reshape -> lane-dense minor dim of width B*D.
    x2 = x.reshape(S, BD)
    if S % 8 == 0:
        pe2 = pe.reshape(max_len, D)      # full buffer; index_map reads only first S rows
    else:
        pe2 = pe[:S].reshape(S, D)        # ragged fallback so block == full dims

    row_bytes = BD * x.dtype.itemsize
    if tile_s is None:
        tile_s = _pick_tile_s(S, row_bytes)
    assert S % tile_s == 0, "seq_len must be divisible by tile_s"
    grid = (S // tile_s,)

    x_spec = pl.BlockSpec((tile_s, BD), lambda i: (i, 0))
    pe_spec = pl.BlockSpec((tile_s, D), lambda i: (i, 0))
    out_spec = pl.BlockSpec((tile_s, BD), lambda i: (i, 0))
    cparams = pltpu.CompilerParams(dimension_semantics=("parallel",))

    if training and dropout_p > 0.0:
        if rng_key is None:
            rng_key = jax.random.PRNGKey(0)
        # TODO(synk): torch's RNG stream cannot be reproduced bit-exactly; dropout
        # semantics (zero-or-scaled with keep prob 1-p) are preserved.
        bits = jax.random.bits(rng_key, (S, BD), dtype=jnp.uint32)
        kernel = functools.partial(_pe_add_dropout_kernel, batch=B, p=float(dropout_p))
        nbytes = int(2 * x.size * x.dtype.itemsize
                     + S * D * pe.dtype.itemsize + bits.size * 4)
        out2 = pl.pallas_call(
            kernel,
            out_shape=jax.ShapeDtypeStruct((S, BD), x.dtype),
            grid=grid,
            in_specs=[x_spec, pe_spec, pl.BlockSpec((tile_s, BD), lambda i: (i, 0))],
            out_specs=out_spec,
            compiler_params=cparams,
            cost_estimate=pl.CostEstimate(flops=2 * x.size, transcendentals=0,
                                          bytes_accessed=nbytes),
        )(x2, pe2, bits)
    else:
        kernel = functools.partial(_pe_add_kernel, batch=B)
        nbytes = int(2 * x.size * x.dtype.itemsize + S * D * pe.dtype.itemsize)
        out2 = pl.pallas_call(
            kernel,
            out_shape=jax.ShapeDtypeStruct((S, BD), x.dtype),
            grid=grid,
            in_specs=[x_spec, pe_spec],
            out_specs=out_spec,
            compiler_params=cparams,
            cost_estimate=pl.CostEstimate(flops=x.size, transcendentals=0,
                                          bytes_accessed=nbytes),
        )(x2, pe2)

    return out2.reshape(S, B, D)


if __name__ == "__main__":
    key = jax.random.PRNGKey(0)

    # Small shapes consistent with the module: (seq_len, batch, d_model).
    S, B, D = 8, 4, 128
    MAX_LEN = 64

    x = jax.random.normal(key, (S, B, D), jnp.float32)
    pe = make_positional_encoding_table(D, max_len=MAX_LEN, dtype=jnp.float32)

    # --- eval mode (dropout = identity): exact check against reference --------
    out = positional_encoding_pallas(x, pe, dropout_p=0.1, training=False)
    out = jax.block_until_ready(out)
    ref = x + pe[:S]
    assert out.shape == x.shape
    assert jnp.allclose(out, ref, atol=1e-6, rtol=1e-6)

    # --- longer sequence: auto-tiling picks tile_s=16 -> grid=(2,) parallel ---
    S2 = 32
    x2 = jax.random.normal(jax.random.PRNGKey(1), (S2, B, D), jnp.float32)
    out2 = jax.block_until_ready(positional_encoding_pallas(x2, pe, training=False))
    ref2 = x2 + pe[:S2]
    assert jnp.allclose(out2, ref2, atol=1e-6, rtol=1e-6)

    # --- training mode: every element is either dropped (0) or (x+pe)/(1-p) ---
    p = 0.1
    out_d = positional_encoding_pallas(x, pe, dropout_p=p, training=True,
                                       rng_key=jax.random.PRNGKey(1234))
    out_d = jax.block_until_ready(out_d)
    kept = ref / (1.0 - p)
    is_zero = jnp.isclose(out_d, 0.0, atol=1e-6)
    is_kept = jnp.isclose(out_d, kept, atol=1e-5, rtol=1e-5)
    assert out_d.shape == x.shape
    assert bool(jnp.all(is_zero | is_kept))

    print("KERNEL_OK")
</pallas_src>

<mosaic_0001>
module attributes {stable_mosaic.version = 11 : i64} {
  func.func @_pe_add_kernel(%arg0: i32, %arg1: memref<8x512xf32, #tpu.memory_space<vmem>>, %arg2: memref<8x128xf32, #tpu.memory_space<vmem>>, %arg3: memref<8x512xf32, #tpu.memory_space<vmem>>) attributes {dimension_semantics = [#tpu.dimension_semantics<parallel>], iteration_bounds = array<i64: 1>, scalar_prefetch = 0 : i64, scratch_operands = 0 : i64, tpu.core_type = #tpu.core_type<tc>, window_params = [{transform_indices = @transform_0, window_bounds = array<i64: 8, 512>}, {transform_indices = @transform_1, window_bounds = array<i64: 8, 128>}, {transform_indices = @transform_2, window_bounds = array<i64: 8, 512>}]} {
    %c0 = arith.constant 0 : index
    %c0_0 = arith.constant 0 : index
    %0 = vector.load %arg2[%c0, %c0_0] : memref<8x128xf32, #tpu.memory_space<vmem>>, vector<8x128xf32>
    %1 = tpu.concatenate %0, %0, %0, %0 in 1 : vector<8x128xf32>, vector<8x128xf32>, vector<8x128xf32>, vector<8x128xf32> -> vector<8x512xf32>
    %c0_1 = arith.constant 0 : index
    %c0_2 = arith.constant 0 : index
    %2 = vector.load %arg1[%c0_1, %c0_2] : memref<8x512xf32, #tpu.memory_space<vmem>>, vector<8x512xf32>
    %3 = arith.addf %2, %1 : vector<8x512xf32>
    %c0_3 = arith.constant 0 : index
    %c0_4 = arith.constant 0 : index
    %4 = vector.load %arg3[%c0_3, %c0_4] : memref<8x512xf32, #tpu.memory_space<vmem>>, vector<8x512xf32>
    tpu.vector_store %arg3[%c0_3, %c0_4], %3 {strides = array<i32>} : memref<8x512xf32, #tpu.memory_space<vmem>>, vector<8x512xf32>,
    return
  }
  func.func @transform_0(%arg0: i32) -> (i32, i32) {
    %c0_i32 = arith.constant 0 : i32
    %c0_i32_0 = arith.constant 0 : i32
    return %arg0, %c0_i32 : i32, i32
  }
  func.func @transform_1(%arg0: i32) -> (i32, i32) {
    %c0_i32 = arith.constant 0 : i32
    %c0_i32_0 = arith.constant 0 : i32
    return %arg0, %c0_i32 : i32, i32
  }
  func.func @transform_2(%arg0: i32) -> (i32, i32) {
    %c0_i32 = arith.constant 0 : i32
    %c0_i32_0 = arith.constant 0 : i32
    return %arg0, %c0_i32 : i32, i32
  }
}

</mosaic_0001>

<llo_original>
// kernel: tpu_custom_call.1
$region0: #{tpu_custom_call.1}
  #allocation0 [shape = 'u32[]', space=smem, size = 0x4, offset = 0x4, fixed_abs, tag = 'smem constant byte address 0x4 - core index']
  #allocation1 [shape = 'u32[144,128]{1,0:T(1,128)}', space=vmem, size = 0x12000, scoped, tag = 'internal scratch']
  %s0 = inlined_call_operand.hbm [shape: f32[8,512], index: 0, kind: input, shape index: {}]
  %s1 = inlined_call_operand.hbm [shape: f32[64,128], index: 1, kind: input, shape index: {}]
  %s2 = inlined_call_operand.hbm [shape: f32[8,512], index: 2, kind: output, shape index: {}]
  %s3 = sld [smem:[#allocation0]]
  $region26: #{tpu_custom_call.1} parent=0
    _
  %s5 = ssub.s32 1, %s3
  %s6 = scalar_select 0, %s5, %s3
  $region1: #{tpu_custom_call.1} parent=0
    #allocation2 [shape = 'u8[16384]{0}', space=vmem, size = 0x4000, scoped, tag = 'input window, operand 0, single buffered']
    #allocation3 [shape = 's32[1]{0}', space=sflag, size = 0x4, scoped, tag = 'scoped memory for tpu_custom_call.1']
    #allocation4 [shape = 's32[1]{0}', space=sflag, size = 0x4, scoped, tag = 'scoped memory for tpu_custom_call.1']
    #allocation5 [shape = 'u8[4096]{0}', space=vmem, size = 0x1000, scoped, tag = 'input window, operand 1, single buffered']
    #allocation6 [shape = 's32[1]{0}', space=sflag, size = 0x4, scoped, tag = 'scoped memory for tpu_custom_call.1']
    #allocation7 [shape = 'u8[16384]{0}', space=vmem, size = 0x4000, scoped, tag = 'output window, operand 0, single buffered']
    %7 = vsyncpa [#allocation3], 0
    %8 = vsyncpa [#allocation6], 0
    %9 = vsyncpa [#allocation4], 0
    // Predicated region
    $region2: #{tpu_custom_call.1} parent=1 // pred_check
      _
    $region3: #{tpu_custom_call.1} parent=1 // pred_check_branch
      %11 = sbr.rel (0) target = $region5
    $region4: #{tpu_custom_call.1} parent=1 // pred_region
      %s13 = ssub.s32 512, 512
      %14 = vsyncadd [#allocation3], %s13
      %s16 = sshll.u32 [#allocation2], 4
      %s17 = int_to_ptr.vmem [resolvable:$true] %s16
      %19 = dma.hbm_to_vmem [thread:$0]  %s0, 512, %s17, [#allocation3]
    $region5: #{tpu_custom_call.1} parent=1 // pred_fallthru
      _
    // Predicated region
    $region6: #{tpu_custom_call.1} parent=1 // pred_check
      _
    $region7: #{tpu_custom_call.1} parent=1 // pred_check_branch
      %21 = sbr.rel (0) target = $region9
    $region8: #{tpu_custom_call.1} parent=1 // pred_region
      %s23 = ssub.s32 128, 128
      %24 = vsyncadd [#allocation6], %s23
      %s26 = sshll.u32 [#allocation5], 4
      %s27 = int_to_ptr.vmem [resolvable:$true] %s26
      %29 = dma.hbm_to_vmem [thread:$0]  %s1, 128, %s27, [#allocation6]
    $region9: #{tpu_custom_call.1} parent=1 // pred_fallthru
      _
    // Predicated region
    $region10: #{tpu_custom_call.1} parent=1 // pred_check
      _
    $region11: #{tpu_custom_call.1} parent=1 // pred_check_branch
      %31 = sbr.rel (0) target = $region13
    $region12: #{tpu_custom_call.1} parent=1 // pred_region
      %32 = dma.done [#allocation3], 512
    $region13: #{tpu_custom_call.1} parent=1 // pred_fallthru
      _
    // Predicated region
    $region14: #{tpu_custom_call.1} parent=1 // pred_check
      _
    $region15: #{tpu_custom_call.1} parent=1 // pred_check_branch
      %34 = sbr.rel (0) target = $region17
    $region16: #{tpu_custom_call.1} parent=1 // pred_region
      %35 = dma.done [#allocation6], 128
    $region17: #{tpu_custom_call.1} parent=1 // pred_fallthru
      _
    %v36 = vld [vmem:[#allocation5] sm:$0xff]
    %v37 = vld [vmem:[#allocation2] sm:$0xff]
    %v38 = vld [vmem:[#allocation2 + $0x8] sm:$0xff]
    %v39 = vld [vmem:[#allocation2 + $0x10] sm:$0xff]
    %v40 = vld [vmem:[#allocation2 + $0x18] sm:$0xff]
    %v41 = vadd.f32 %v37, %v36
    %v42 = vadd.f32 %v38, %v36
    %v43 = vadd.f32 %v39, %v36
    %v44 = vadd.f32 %v40, %v36
    %45 = vst [vmem:[#allocation7] sm:$0xff] %v41
    %46 = vst [vmem:[#allocation7 + $0x8] sm:$0xff] %v42
    %47 = vst [vmem:[#allocation7 + $0x10] sm:$0xff] %v43
    %48 = vst [vmem:[#allocation7 + $0x18] sm:$0xff] %v44
    // Predicated region
    $region18: #{tpu_custom_call.1} parent=1 // pred_check
      _
    $region19: #{tpu_custom_call.1} parent=1 // pred_check_branch
      %50 = sbr.rel (0) target = $region21
    $region20: #{tpu_custom_call.1} parent=1 // pred_region
      %s52 = ssub.s32 512, 512
      %53 = vsyncadd [#allocation4], %s52
      %s55 = sshll.u32 [#allocation7], 4
      %s56 = int_to_ptr.vmem [resolvable:$true] %s55
      %58 = dma.vmem_to_hbm [thread:$0]  %s56, 512, %s2, [#allocation4]
    $region21: #{tpu_custom_call.1} parent=1 // pred_fallthru
      _
    // Predicated region
    $region22: #{tpu_custom_call.1} parent=1 // pred_check
      _
    $region23: #{tpu_custom_call.1} parent=1 // pred_check_branch
      %60 = sbr.rel (0) target = $region25
    $region24: #{tpu_custom_call.1} parent=1 // pred_region
      %61 = dma.done [#allocation4], 512
    $region25: #{tpu_custom_call.1} parent=1 // pred_fallthru
      _
    %62 = vsyncpa [#allocation3], 1
    %63 = vsyncpa [#allocation6], 1
    %64 = vsyncpa [#allocation4], 1

</llo_original>
